<compile_context>
chip_gen: v5e
topology: v5e:2x2
jax: 0.10.0
libtpu: 0.0.40
codegen_flags: <defaults>
</compile_context>

<pallas_src>
import functools

import jax
import jax.numpy as jnp
from jax import lax
from jax.experimental import pallas as pl
from jax.experimental.pallas import tpu as pltpu


def _round_up(x, m):
    return (x + m - 1) // m * m


def _ir_kernel(x_ref, w1_ref, b1_ref, w2_ref, b2_ref, o_ref, *,
               tap_offsets, l_out, res_offset, use_res, final_act):
    """Fused InvertedResidual for one image.

    x_ref : (1, Cpack, L_in)   channels on sublanes, flattened (padded-width) spatial on lanes
    w1_ref: (hid_p, 9*cin_p)   3x3 conv weights with BN1 scale folded in
    b1_ref: (hid_p, 1)         BN1 folded bias
    w2_ref: (cout_p, hid_p)    1x1 conv weights with BN2 scale folded in
    b2_ref: (cout_p, 1)        BN2 folded bias
    o_ref : (1, cout_p, l_out)
    """
    xp = x_ref[0]                                            # single VMEM load of the image
    # Conv taps = lane-shifted views of the one resident buffer, stacked along the
    # contraction axis -> one big-K MXU matmul instead of 9 small-K ones.
    taps = [xp[:, s:s + l_out] for s in tap_offsets]
    xk = taps[0] if len(taps) == 1 else jnp.concatenate(taps, axis=0)

    # 3x3 conv (+ folded BN1 scale) as a single MXU matmul, default precision, f32 acc.
    h = jnp.dot(w1_ref[...], xk, preferred_element_type=jnp.float32)
    h = jnp.clip(h + b1_ref[...], 0.0, 6.0)                  # BN1 bias + ReLU6

    # 1x1 conv (+ folded BN2 scale) + bias.
    out = jnp.dot(w2_ref[...], h, preferred_element_type=jnp.float32)
    out = out + b2_ref[...]
    if final_act:                                            # res_1x1 built with act=True
        out = jnp.clip(out, 0.0, 6.0)
    if use_res:                                              # stride==1 and Cin==Cout
        out = out + xp[:, res_offset:res_offset + l_out]     # center tap == original x
    o_ref[0] = out.astype(o_ref.dtype)


def _fold_bn(gamma, beta, mean, var, eps):
    scale = gamma * lax.rsqrt(var + eps)
    bias = beta - mean * scale
    return scale, bias


def inverted_residual(x, w_exp, bn1, w_res, bn2, *, stride=1, act=False, eps=1e-5):
    """Fused forward of InvertedResidual (expand_ratio != 1, squeeze_exactation=False).

    x     : (B, Cin, H, W)       NCHW float32
    w_exp : (hidden, Cin, 3, 3)  OIHW weights of the 3x3 expand conv
    bn1   : (gamma, beta, running_mean, running_var), each (hidden,)
    w_res : (Cout, hidden, 1, 1) weights of the 1x1 project conv
    bn2   : (gamma, beta, running_mean, running_var), each (Cout,)
    """
    assert stride in (1, 2)
    B, Cin, H, W = x.shape
    hidden = w_exp.shape[0]
    Cout = w_res.shape[0]
    use_res = (stride == 1) and (Cin == Cout)

    Ho = (H + 2 - 3) // stride + 1
    Wo = (W + 2 - 3) // stride + 1

    cin_p = _round_up(Cin, 8)       # f32 sublane tile
    cout_p = _round_up(Cout, 8)
    hid_p = _round_up(hidden, 8)

    # ---- fold inference BatchNorm: scale into weights, keep only per-channel bias.
    s1, b1 = _fold_bn(*bn1, eps)
    s2, b2 = _fold_bn(*bn2, eps)

    # 3x3 weights -> one (hid_p, 9*cin_p) matrix; column order k*cin_p + c, k = dy*3+dx,
    # matching the in-kernel tap concatenation (and the stride-2 wrapper im2col).
    w1 = jnp.transpose(w_exp, (2, 3, 0, 1)).reshape(9, hidden, Cin) * s1[None, :, None]
    w1 = jnp.pad(w1, ((0, 0), (0, hid_p - hidden), (0, cin_p - Cin)))
    w1 = jnp.transpose(w1, (1, 0, 2)).reshape(hid_p, 9 * cin_p).astype(jnp.float32)

    w2 = w_res[:, :, 0, 0] * s2[:, None]
    w2 = jnp.pad(w2, ((0, cout_p - Cout), (0, hid_p - hidden))).astype(jnp.float32)

    b1 = jnp.pad(b1, (0, hid_p - hidden)).reshape(hid_p, 1).astype(jnp.float32)
    b2 = jnp.pad(b2, (0, cout_p - Cout)).reshape(cout_p, 1).astype(jnp.float32)

    # Zero-pad channels to the sublane tile and spatial by 1 (conv padding).
    x_pad = jnp.pad(x, ((0, 0), (0, cin_p - Cin), (1, 1), (1, 1)))   # (B, cin_p, H+2, W+2)

    if stride == 1:
        # Shift-conv layout: output pixel (r, c) lives at flat lane r*(W+2) + c of the
        # flattened padded image, and tap (dy, dx) is the SAME buffer shifted by
        # dy*(W+2) + dx lanes.  Columns W / W+1 of each output row are garbage and are
        # sliced away below.  No activation duplication in HBM.
        Wp = W + 2
        l_out = _round_up(H * Wp, 128)                    # lane-dense output (mult of 128)
        tap_offsets = tuple(dy * Wp + dx for dy in range(3) for dx in range(3))
        res_offset = Wp + 1                               # center tap == original x
        l_in = _round_up(l_out + 2 * Wp + 2, 128)         # room for the largest tap shift
        x_flat = x_pad.reshape(B, cin_p, (H + 2) * Wp)
        x_flat = jnp.pad(x_flat, ((0, 0), (0, 0), (0, l_in - (H + 2) * Wp)))
        cpack = cin_p
    else:
        # stride == 2: no constant-lane-shift form exists; wrapper-side im2col already
        # concatenated along K so the kernel still does a single matmul (no residual here).
        l_out = _round_up(Ho * Wo, 128)
        tap_offsets = (0,)
        res_offset = 0
        l_in = l_out
        taps = []
        for dy in range(3):
            for dx in range(3):
                t = x_pad[:, :, dy:dy + stride * (Ho - 1) + 1:stride,
                                dx:dx + stride * (Wo - 1) + 1:stride]
                taps.append(t.reshape(B, cin_p, Ho * Wo))
        x_flat = jnp.concatenate(taps, axis=1)            # (B, 9*cin_p, Ho*Wo)
        x_flat = jnp.pad(x_flat, ((0, 0), (0, 0), (0, l_out - Ho * Wo)))
        cpack = 9 * cin_p

    kernel = functools.partial(_ir_kernel, tap_offsets=tap_offsets, l_out=l_out,
                               res_offset=res_offset, use_res=use_res, final_act=act)

    out = pl.pallas_call(
        kernel,
        out_shape=jax.ShapeDtypeStruct((B, cout_p, l_out), x.dtype),
        grid_spec=pltpu.PrefetchScalarGridSpec(
            num_scalar_prefetch=0,
            grid=(B,),   # one image per step; weights stay resident (constant index_map)
            in_specs=[
                pl.BlockSpec((1, cpack, l_in), lambda b: (b, 0, 0)),
                pl.BlockSpec((hid_p, 9 * cin_p), lambda b: (0, 0)),
                pl.BlockSpec((hid_p, 1), lambda b: (0, 0)),
                pl.BlockSpec((cout_p, hid_p), lambda b: (0, 0)),
                pl.BlockSpec((cout_p, 1), lambda b: (0, 0)),
            ],
            out_specs=pl.BlockSpec((1, cout_p, l_out), lambda b: (b, 0, 0)),
        ),
        compiler_params=pltpu.CompilerParams(
            dimension_semantics=("parallel",),
            vmem_limit_bytes=64 * 1024 * 1024,
        ),
    )(x_flat, w1, b1, w2, b2)

    if stride == 1:
        y = out[:, :Cout, :H * (W + 2)].reshape(B, Cout, H, W + 2)[:, :, :, :W]
    else:
        y = out[:, :Cout, :Ho * Wo].reshape(B, Cout, Ho, Wo)
    return y


def _reference_forward(x, w_exp, bn1, w_res, bn2, *, stride, act, eps=1e-5):
    """Pure-JAX reference of the PyTorch module's forward (inference BN)."""
    dn = ('NCHW', 'OIHW', 'NCHW')

    def bn(y, params):
        g, b, m, v = params
        g = g[None, :, None, None]
        b = b[None, :, None, None]
        m = m[None, :, None, None]
        v = v[None, :, None, None]
        return (y - m) * lax.rsqrt(v + eps) * g + b

    y = lax.conv_general_dilated(x, w_exp, (stride, stride), ((1, 1), (1, 1)),
                                 dimension_numbers=dn,
                                 precision=lax.Precision.HIGHEST)
    y = jnp.clip(bn(y, bn1), 0.0, 6.0)
    y = lax.conv_general_dilated(y, w_res, (1, 1), ((0, 0), (0, 0)),
                                 dimension_numbers=dn,
                                 precision=lax.Precision.HIGHEST)
    y = bn(y, bn2)
    if act:
        y = jnp.clip(y, 0.0, 6.0)
    if stride == 1 and x.shape[1] == w_res.shape[0]:
        y = y + x
    return y


if __name__ == "__main__":
    key = jax.random.PRNGKey(0)
    keys = jax.random.split(key, 11)

    # Small shapes consistent with the module: B=2, Cin=Cout=4, H=W=16,
    # expand_ratio=4 -> hidden=16.
    B, Cin, H, W = 2, 4, 16, 16
    expand_ratio, Cout, act = 4, 4, False
    hidden = int(round(Cin * expand_ratio))

    x = jax.random.normal(keys[0], (B, Cin, H, W), dtype=jnp.float32)
    w_exp = 0.2 * jax.random.normal(keys[1], (hidden, Cin, 3, 3), dtype=jnp.float32)
    w_res = 0.2 * jax.random.normal(keys[2], (Cout, hidden, 1, 1), dtype=jnp.float32)
    bn1 = (1.0 + 0.1 * jax.random.normal(keys[3], (hidden,), dtype=jnp.float32),   # gamma
           0.1 * jax.random.normal(keys[4], (hidden,), dtype=jnp.float32),         # beta
           0.1 * jax.random.normal(keys[5], (hidden,), dtype=jnp.float32),         # running_mean
           0.5 + jax.nn.softplus(jax.random.normal(keys[6], (hidden,), dtype=jnp.float32)))  # var > 0
    bn2 = (1.0 + 0.1 * jax.random.normal(keys[7], (Cout,), dtype=jnp.float32),
           0.1 * jax.random.normal(keys[8], (Cout,), dtype=jnp.float32),
           0.1 * jax.random.normal(keys[9], (Cout,), dtype=jnp.float32),
           0.5 + jax.nn.softplus(jax.random.normal(keys[10], (Cout,), dtype=jnp.float32)))

    # stride=1 exercises the residual + in-kernel shift-conv path,
    # stride=2 exercises the K-concatenated im2col fallback (no residual).
    for stride in (1, 2):
        y = inverted_residual(x, w_exp, bn1, w_res, bn2, stride=stride, act=act)
        y = jax.block_until_ready(y)
        y_ref = _reference_forward(x, w_exp, bn1, w_res, bn2, stride=stride, act=act)
        assert y.shape == y_ref.shape and y.dtype == x.dtype
        # Kernel uses default (single-pass) MXU precision vs an f32-HIGHEST reference,
        # so compare with bf16-level tolerance.
        max_err = float(jnp.max(jnp.abs(y - y_ref)))
        assert jnp.allclose(y, y_ref, atol=5e-2, rtol=2e-2), (
            f"stride={stride}: mismatch vs reference, max abs err = {max_err}")

    print("KERNEL_OK")
</pallas_src>

<mosaic_0001>
module attributes {stable_mosaic.version = 11 : i64} {
  func.func @_ir_kernel(%arg0: i32, %arg1: memref<1x8x512xf32, #tpu.memory_space<vmem>>, %arg2: memref<16x72xf32, #tpu.memory_space<vmem>>, %arg3: memref<16x1xf32, #tpu.memory_space<vmem>>, %arg4: memref<8x16xf32, #tpu.memory_space<vmem>>, %arg5: memref<8x1xf32, #tpu.memory_space<vmem>>, %arg6: memref<1x8x384xf32, #tpu.memory_space<vmem>>) attributes {dimension_semantics = [#tpu.dimension_semantics<parallel>], iteration_bounds = array<i64: 2>, scalar_prefetch = 0 : i64, scratch_operands = 0 : i64, tpu.core_type = #tpu.core_type<tc>, window_params = [{transform_indices = @transform_0, window_bounds = array<i64: 1, 8, 512>}, {pipeline_mode = #tpu.pipeline_mode<synchronous>, transform_indices = @transform_1, window_bounds = array<i64: 16, 72>}, {pipeline_mode = #tpu.pipeline_mode<synchronous>, transform_indices = @transform_2, window_bounds = array<i64: 16, 1>}, {pipeline_mode = #tpu.pipeline_mode<synchronous>, transform_indices = @transform_3, window_bounds = array<i64: 8, 16>}, {pipeline_mode = #tpu.pipeline_mode<synchronous>, transform_indices = @transform_4, window_bounds = array<i64: 8, 1>}, {transform_indices = @transform_5, window_bounds = array<i64: 1, 8, 384>}]} {
    %c0 = arith.constant 0 : index
    %c0_0 = arith.constant 0 : index
    %c0_1 = arith.constant 0 : index
    %0 = vector.load %arg1[%c0, %c0_0, %c0_1] : memref<1x8x512xf32, #tpu.memory_space<vmem>>, vector<1x8x512xf32>
    %1 = vector.shape_cast %0 : vector<1x8x512xf32> to vector<8x512xf32>
    %2 = vector.extract_strided_slice %1 {offsets = [0, 0], sizes = [8, 384], strides = [1, 1]} : vector<8x512xf32> to vector<8x384xf32>
    %3 = vector.extract_strided_slice %1 {offsets = [0, 1], sizes = [8, 384], strides = [1, 1]} : vector<8x512xf32> to vector<8x384xf32>
    %4 = vector.extract_strided_slice %1 {offsets = [0, 2], sizes = [8, 384], strides = [1, 1]} : vector<8x512xf32> to vector<8x384xf32>
    %5 = vector.extract_strided_slice %1 {offsets = [0, 18], sizes = [8, 384], strides = [1, 1]} : vector<8x512xf32> to vector<8x384xf32>
    %6 = vector.extract_strided_slice %1 {offsets = [0, 19], sizes = [8, 384], strides = [1, 1]} : vector<8x512xf32> to vector<8x384xf32>
    %7 = vector.extract_strided_slice %1 {offsets = [0, 20], sizes = [8, 384], strides = [1, 1]} : vector<8x512xf32> to vector<8x384xf32>
    %8 = vector.extract_strided_slice %1 {offsets = [0, 36], sizes = [8, 384], strides = [1, 1]} : vector<8x512xf32> to vector<8x384xf32>
    %9 = vector.extract_strided_slice %1 {offsets = [0, 37], sizes = [8, 384], strides = [1, 1]} : vector<8x512xf32> to vector<8x384xf32>
    %10 = vector.extract_strided_slice %1 {offsets = [0, 38], sizes = [8, 384], strides = [1, 1]} : vector<8x512xf32> to vector<8x384xf32>
    %11 = tpu.concatenate %2, %3, %4, %5, %6, %7, %8, %9, %10 in 0 : vector<8x384xf32>, vector<8x384xf32>, vector<8x384xf32>, vector<8x384xf32>, vector<8x384xf32>, vector<8x384xf32>, vector<8x384xf32>, vector<8x384xf32>, vector<8x384xf32> -> vector<72x384xf32>
    %c0_2 = arith.constant 0 : index
    %c0_3 = arith.constant 0 : index
    %12 = vector.load %arg2[%c0_2, %c0_3] : memref<16x72xf32, #tpu.memory_space<vmem>>, vector<16x72xf32>
    %cst = arith.constant dense<0.000000e+00> : vector<16x384xf32>
    %13 = tpu.matmul %12, %11, %cst {dimension_numbers = #tpu.dot_dimension_numbers<[1], [0], [0], [1], [0, 0, 1, 1], [], []>} : vector<16x72xf32>, vector<72x384xf32>, vector<16x384xf32> -> vector<16x384xf32>
    %c0_4 = arith.constant 0 : index
    %c0_5 = arith.constant 0 : index
    %14 = vector.load %arg3[%c0_4, %c0_5] : memref<16x1xf32, #tpu.memory_space<vmem>>, vector<16x1xf32>
    %15 = vector.broadcast %14 : vector<16x1xf32> to vector<16x384xf32>
    %16 = arith.addf %13, %15 : vector<16x384xf32>
    %cst_6 = arith.constant 0.000000e+00 : f32
    %cst_7 = arith.constant 6.000000e+00 : f32
    %17 = vector.broadcast %cst_6 : f32 to vector<16x384xf32>
    %18 = arith.maximumf %17, %16 : vector<16x384xf32>
    %19 = vector.broadcast %cst_7 : f32 to vector<16x384xf32>
    %20 = arith.minimumf %19, %18 : vector<16x384xf32>
    %c0_8 = arith.constant 0 : index
    %c0_9 = arith.constant 0 : index
    %21 = vector.load %arg4[%c0_8, %c0_9] : memref<8x16xf32, #tpu.memory_space<vmem>>, vector<8x16xf32>
    %cst_10 = arith.constant dense<0.000000e+00> : vector<8x384xf32>
    %22 = tpu.matmul %21, %20, %cst_10 {dimension_numbers = #tpu.dot_dimension_numbers<[1], [0], [0], [1], [0, 0, 1, 1], [], []>} : vector<8x16xf32>, vector<16x384xf32>, vector<8x384xf32> -> vector<8x384xf32>
    %c0_11 = arith.constant 0 : index
    %c0_12 = arith.constant 0 : index
    %23 = vector.load %arg5[%c0_11, %c0_12] : memref<8x1xf32, #tpu.memory_space<vmem>>, vector<8x1xf32>
    %24 = vector.broadcast %23 : vector<8x1xf32> to vector<8x384xf32>
    %25 = arith.addf %22, %24 : vector<8x384xf32>
    %26 = vector.extract_strided_slice %1 {offsets = [0, 19], sizes = [8, 384], strides = [1, 1]} : vector<8x512xf32> to vector<8x384xf32>
    %27 = arith.addf %25, %26 : vector<8x384xf32>
    %c0_13 = arith.constant 0 : index
    %c0_14 = arith.constant 0 : index
    %c0_15 = arith.constant 0 : index
    %28 = vector.load %arg6[%c0_13, %c0_14, %c0_15] : memref<1x8x384xf32, #tpu.memory_space<vmem>>, vector<1x8x384xf32>
    %29 = vector.shape_cast %28 : vector<1x8x384xf32> to vector<8x384xf32>
    %30 = vector.shape_cast %27 : vector<8x384xf32> to vector<1x8x384xf32>
    tpu.vector_store %arg6[%c0_13, %c0_14, %c0_15], %30 {strides = array<i32>} : memref<1x8x384xf32, #tpu.memory_space<vmem>>, vector<1x8x384xf32>,
    return
  }
  func.func @transform_0(%arg0: i32) -> (i32, i32, i32) {
    %c0_i32 = arith.constant 0 : i32
    %c0_i32_0 = arith.constant 0 : i32
    %c0_i32_1 = arith.constant 0 : i32
    return %arg0, %c0_i32, %c0_i32_0 : i32, i32, i32
  }
  func.func @transform_1(%arg0: i32) -> (i32, i32) {
    %c0_i32 = arith.constant 0 : i32
    %c0_i32_0 = arith.constant 0 : i32
    %c0_i32_1 = arith.constant 0 : i32
    return %c0_i32, %c0_i32_0 : i32, i32
  }
  func.func @transform_2(%arg0: i32) -> (i32, i32) {
    %c0_i32 = arith.constant 0 : i32
    %c0_i32_0 = arith.constant 0 : i32
    %c0_i32_1 = arith.constant 0 : i32
    return %c0_i32, %c0_i32_0 : i32, i32
  }
  func.func @transform_3(%arg0: i32) -> (i32, i32) {
    %c0_i32 = arith.constant 0 : i32
    %c0_i32_0 = arith.constant 0 : i32
    %c0_i32_1 = arith.constant 0 : i32
    return %c0_i32, %c0_i32_0 : i32, i32
  }
  func.func @transform_4(%arg0: i32) -> (i32, i32) {
    %c0_i32 = arith.constant 0 : i32
    %c0_i32_0 = arith.constant 0 : i32
    %c0_i32_1 = arith.constant 0 : i32
    return %c0_i32, %c0_i32_0 : i32, i32
  }
  func.func @transform_5(%arg0: i32) -> (i32, i32, i32) {
    %c0_i32 = arith.constant 0 : i32
    %c0_i32_0 = arith.constant 0 : i32
    %c0_i32_1 = arith.constant 0 : i32
    return %arg0, %c0_i32, %c0_i32_0 : i32, i32, i32
  }
}

</mosaic_0001>

<llo_original>
// kernel: tpu_custom_call.1
$region0: #{tpu_custom_call.1}
  #allocation0 [shape = 'u32[]', space=smem, size = 0x4, offset = 0x4, fixed_abs, tag = 'smem constant byte address 0x4 - core index']
  #allocation1 [shape = 'u32[72,128]{1,0:T(1,128)}', space=vmem, size = 0x9000, scoped, tag = 'internal scratch']
  %s0 = inlined_call_operand.hbm [shape: f32[2,8,512], index: 0, kind: input, shape index: {}]
  %s1 = inlined_call_operand.vmem [shape: f32[16,72], index: 1, kind: input, shape index: {}]
  %s2 = inlined_call_operand.vmem [shape: f32[16,1], index: 2, kind: input, shape index: {}]
  %s3 = inlined_call_operand.vmem [shape: f32[8,16], index: 3, kind: input, shape index: {}]
  %s4 = inlined_call_operand.vmem [shape: f32[8,1], index: 4, kind: input, shape index: {}]
  %s5 = inlined_call_operand.hbm [shape: f32[2,8,384], index: 5, kind: output, shape index: {}]
  %s6 = sld [smem:[#allocation0]]
  $region57: #{tpu_custom_call.1} parent=0
    _
  %s8 = ssub.s32 1, %s6
  %s9 = scalar_select 0, %s8, %s6
  $region1: #{tpu_custom_call.1} parent=0
    #allocation2 [shape = 'u8[32768]{0}', space=vmem, size = 0x8000, scoped, tag = 'input window, operand 0']
    #allocation3 [shape = 's32[2]{0}', space=sflag, size = 0x8, scoped, tag = 'scoped memory for tpu_custom_call.1']
    #allocation4 [shape = 's32[2]{0}', space=sflag, size = 0x8, scoped, tag = 'scoped memory for tpu_custom_call.1']
    #allocation5 [shape = 'u8[24576]{0}', space=vmem, size = 0x6000, scoped, tag = 'output window, operand 0']
    %10 = vsyncpa [#allocation3], 0
    %s11 = scalar_lea.sflag [#allocation3], 1
    %12 = vsyncpa %s11, 0
    %13 = vsyncpa [#allocation4], 0
    %s14 = scalar_lea.sflag [#allocation4], 1
    %15 = vsyncpa %s14, 0
    loop: start=0, step=1, limit=4
    $region2: #{tpu_custom_call.1} parent=1 // loop_pre_header
      _
    $region3: #{tpu_custom_call.1} parent=1 // loop_header
      %s17 = sphi 0, %s21
      %p18 = scmp.ge.s32.totalorder %s17, 4
      %s27 = sphi 0, %s29
      %s30 = sphi 0, %s27
      %s31 = sphi 0, %s30
      %s47 = sphi 0, %s31
      %s51 = sphi 0, %s51
      %s53 = sphi 0, %s51
      %s54 = sphi 0, %s53
      %s68 = sphi 0, %s54
      %s72 = sphi 0, %s72
      %s74 = sphi 0, %s72
      %s75 = sphi 0, %s74
      %s89 = sphi 0, %s75
      %s93 = sphi 0, %s93
      %s95 = sphi 0, %s93
      %s96 = sphi 0, %s95
      %s110 = sphi 0, %s96
      %s114 = sphi 0, %s114
      %s116 = sphi 0, %s114
      %s117 = sphi 0, %s116
      %s131 = sphi 0, %s117
      %s137 = sphi 0, %s139
      %s140 = sphi 0, %s137
      %s141 = sphi 0, %s140
      %s157 = sphi 0, %s141
    $region4: #{tpu_custom_call.1} parent=1 // loop_header_branch
      %20 = sbr.rel (%p18) target = $region8
    $region5: #{tpu_custom_call.1} parent=1 // loop_body
      %s22 = ssub.s32 %s17, 1
      %s23 = ssub.s32 %s17, 2
      %s24 = sadd.s32 %s17, 1
      %s25 = ssub.s32 %s17, %s24
      %p26 = scmp.eq.s32.totalorder %s25, 0
      %s28 = sadd.s32 %s27, 1
      %s29 = scalar_select %p26, %s27, %s28
      %p32 = pneg %p26
      %p33 = scmp.eq.s32.totalorder %s17, 1
      %p34 = por %p32, %p33
      %p35 = scmp.ne.s32.totalorder %s27, %s30
      %p36 = scmp.eq.s32.totalorder %s17, 0
      %p37 = por %p35, %p36
      %p38 = scmp.ne.s32.totalorder %s27, %s30
      %p39 = scmp.eq.s32.totalorder %s22, 1
      %p40 = por %p38, %p39
      %p41 = scmp.ne.s32.totalorder %s30, %s31
      %p42 = scmp.eq.s32.totalorder %s22, 0
      %p43 = por %p41, %p42
      %p44 = scmp.ne.s32.totalorder %s30, %s31
      %p45 = scmp.eq.s32.totalorder %s23, 1
      %p46 = por %p44, %p45
      %p48 = scmp.ne.s32.totalorder %s31, %s47
      %p49 = scmp.eq.s32.totalorder %s23, 0
      %p50 = por %p48, %p49
      %s52 = sadd.s32 %s51, 1
      %p55 = scmp.eq.s32.totalorder %s17, 1
      %p56 = scmp.ne.s32.totalorder %s51, %s53
      %p57 = scmp.eq.s32.totalorder %s17, 0
      %p58 = por %p56, %p57
      %p59 = scmp.ne.s32.totalorder %s51, %s53
      %p60 = scmp.eq.s32.totalorder %s22, 1
      %p61 = por %p59, %p60
      %p62 = scmp.ne.s32.totalorder %s53, %s54
      %p63 = scmp.eq.s32.totalorder %s22, 0
      %p64 = por %p62, %p63
      %p65 = scmp.ne.s32.totalorder %s53, %s54
      %p66 = scmp.eq.s32.totalorder %s23, 1
      %p67 = por %p65, %p66
      %p69 = scmp.ne.s32.totalorder %s54, %s68
      %p70 = scmp.eq.s32.totalorder %s23, 0
      %p71 = por %p69, %p70
      %s73 = sadd.s32 %s72, 1
      %p76 = scmp.eq.s32.totalorder %s17, 1
      %p77 = scmp.ne.s32.totalorder %s72, %s74
      %p78 = scmp.eq.s32.totalorder %s17, 0
      %p79 = por %p77, %p78
      %p80 = scmp.ne.s32.totalorder %s72, %s74
      %p81 = scmp.eq.s32.totalorder %s22, 1
      %p82 = por %p80, %p81
      %p83 = scmp.ne.s32.totalorder %s74, %s75
      %p84 = scmp.eq.s32.totalorder %s22, 0
      %p85 = por %p83, %p84
      %p86 = scmp.ne.s32.totalorder %s74, %s75
      %p87 = scmp.eq.s32.totalorder %s23, 1
      %p88 = por %p86, %p87
      %p90 = scmp.ne.s32.totalorder %s75, %s89
      %p91 = scmp.eq.s32.totalorder %s23, 0
      %p92 = por %p90, %p91
      %s94 = sadd.s32 %s93, 1
      %p97 = scmp.eq.s32.totalorder %s17, 1
      %p98 = scmp.ne.s32.totalorder %s93, %s95
      %p99 = scmp.eq.s32.totalorder %s17, 0
      %p100 = por %p98, %p99
      %p101 = scmp.ne.s32.totalorder %s93, %s95
      %p102 = scmp.eq.s32.totalorder %s22, 1
      %p103 = por %p101, %p102
      %p104 = scmp.ne.s32.totalorder %s95, %s96
      %p105 = scmp.eq.s32.totalorder %s22, 0
      %p106 = por %p104, %p105
      %p107 = scmp.ne.s32.totalorder %s95, %s96
      %p108 = scmp.eq.s32.totalorder %s23, 1
      %p109 = por %p107, %p108
      %p111 = scmp.ne.s32.totalorder %s96, %s110
      %p112 = scmp.eq.s32.totalorder %s23, 0
      %p113 = por %p111, %p112
      %s115 = sadd.s32 %s114, 1
      %p118 = scmp.eq.s32.totalorder %s17, 1
      %p119 = scmp.ne.s32.totalorder %s114, %s116
      %p120 = scmp.eq.s32.totalorder %s17, 0
      %p121 = por %p119, %p120
      %p122 = scmp.ne.s32.totalorder %s114, %s116
      %p123 = scmp.eq.s32.totalorder %s22, 1
      %p124 = por %p122, %p123
      %p125 = scmp.ne.s32.totalorder %s116, %s117
      %p126 = scmp.eq.s32.totalorder %s22, 0
      %p127 = por %p125, %p126
      %p128 = scmp.ne.s32.totalorder %s116, %s117
      %p129 = scmp.eq.s32.totalorder %s23, 1
      %p130 = por %p128, %p129
      %p132 = scmp.ne.s32.totalorder %s117, %s131
      %p133 = scmp.eq.s32.totalorder %s23, 0
      %p134 = por %p132, %p133
      %s135 = ssub.s32 %s17, %s24
      %p136 = scmp.eq.s32.totalorder %s135, 0
      %s138 = sadd.s32 %s137, 1
      %s139 = scalar_select %p136, %s137, %s138
      %p142 = pneg %p136
      %p143 = scmp.eq.s32.totalorder %s17, 1
      %p144 = por %p142, %p143
      %p145 = scmp.ne.s32.totalorder %s137, %s140
      %p146 = scmp.eq.s32.totalorder %s17, 0
      %p147 = por %p145, %p146
      %p148 = scmp.ne.s32.totalorder %s137, %s140
      %p149 = scmp.eq.s32.totalorder %s22, 1
      %p150 = por %p148, %p149
      %p151 = scmp.ne.s32.totalorder %s140, %s141
      %p152 = scmp.eq.s32.totalorder %s22, 0
      %p153 = por %p151, %p152
      %p154 = scmp.ne.s32.totalorder %s140, %s141
      %p155 = scmp.eq.s32.totalorder %s23, 1
      %p156 = por %p154, %p155
      %p158 = scmp.ne.s32.totalorder %s141, %s157
      %p159 = scmp.eq.s32.totalorder %s23, 0
      %p160 = por %p158, %p159
      %p161 = scmp.le.s32.totalorder 1, %s17
      %p162 = scmp.lt.s32.totalorder %s17, 3
      %p163 = pnand %p161, %p162
      %p164 = pneg %p163
      // Predicated region
      $region9: #{tpu_custom_call.1} parent=5 // pred_check
        _
      $region10: #{tpu_custom_call.1} parent=5 // pred_check_branch
        %166 = sbr.rel (%p163) target = $region12
      $region11: #{tpu_custom_call.1} parent=5 // pred_region
        %s167 = ssub.s32 %s17, 1
        // Predicated region
        $region13: #{tpu_custom_call.1} parent=11 // pred_check
          %p168 = pneg %p64
        $region14: #{tpu_custom_call.1} parent=11 // pred_check_branch
          %170 = sbr.rel (%p168) target = $region16
        $region15: #{tpu_custom_call.1} parent=11 // pred_region
          _
        $region16: #{tpu_custom_call.1} parent=11 // pred_fallthru
          _
        // Predicated region
        $region17: #{tpu_custom_call.1} parent=11 // pred_check
          %p171 = pneg %p85
        $region18: #{tpu_custom_call.1} parent=11 // pred_check_branch
          %173 = sbr.rel (%p171) target = $region20
        $region19: #{tpu_custom_call.1} parent=11 // pred_region
          _
        $region20: #{tpu_custom_call.1} parent=11 // pred_fallthru
          _
        // Predicated region
        $region21: #{tpu_custom_call.1} parent=11 // pred_check
          %p174 = pneg %p106
        $region22: #{tpu_custom_call.1} parent=11 // pred_check_branch
          %176 = sbr.rel (%p174) target = $region24
        $region23: #{tpu_custom_call.1} parent=11 // pred_region
          _
        $region24: #{tpu_custom_call.1} parent=11 // pred_fallthru
          _
        // Predicated region
        $region25: #{tpu_custom_call.1} parent=11 // pred_check
          %p177 = pneg %p127
        $region26: #{tpu_custom_call.1} parent=11 // pred_check_branch
          %179 = sbr.rel (%p177) target = $region28
        $region27: #{tpu_custom_call.1} parent=11 // pred_region
          _
        $region28: #{tpu_custom_call.1} parent=11 // pred_fallthru
          _
      $region12: #{tpu_custom_call.1} parent=5 // pred_fallthru
        _
      %p180 = scmp.lt.s32.totalorder %s17, 2
      // Predicated region
      $region29: #{tpu_custom_call.1} parent=5 // pred_check
        %p181 = pneg %p180
      $region30: #{tpu_custom_call.1} parent=5 // pred_check_branch
        %183 = sbr.rel (%p181) target = $region32
      $region31: #{tpu_custom_call.1} parent=5 // pred_region
        // Predicated region
        $region33: #{tpu_custom_call.1} parent=31 // pred_check
          %p184 = pneg %p37
        $region34: #{tpu_custom_call.1} parent=31 // pred_check_branch
          %186 = sbr.rel (%p184) target = $region36
        $region35: #{tpu_custom_call.1} parent=31 // pred_region
          %s187 = sand.u32 %s27, 1
          %s188 = scalar_lea.sflag [#allocation3], %s187
          %s189 = sand.u32 %s27, 1
          %s190 = smul.addr %s189, 32
          %s191 = scalar_lea.vmem [#allocation2], %s190
          %193 = vsyncadd %s188, 0
          %s194 = smul.addr %s17, 4
          %s195 = smul.addr %s194, 8
          %s196 = scalar_lea.hbm %s0, %s195
          %s198 = sshll.u32 %s196, 4
          %s199 = int_to_ptr.hbm [resolvable:$true] %s198
          %s200 = sshll.u32 %s191, 4
          %s201 = int_to_ptr.vmem [resolvable:$true] %s200
          %203 = dma.hbm_to_vmem [thread:$0]  %s199, 512, %s201, %s188
        $region36: #{tpu_custom_call.1} parent=31 // pred_fallthru
          _
      $region32: #{tpu_custom_call.1} parent=5 // pred_fallthru
        _
      %p204 = scmp.le.s32.totalorder 1, %s17
      %p205 = scmp.lt.s32.totalorder %s17, 3
      %p206 = pnand %p204, %p205
      %p207 = pneg %p206
      // Predicated region
      $region37: #{tpu_custom_call.1} parent=5 // pred_check
        _
      $region38: #{tpu_custom_call.1} parent=5 // pred_check_branch
        %209 = sbr.rel (%p206) target = $region40
      $region39: #{tpu_custom_call.1} parent=5 // pred_region
        %s210 = ssub.s32 %s17, 1
        %s211 = sand.u32 %s30, 1
        %s212 = scalar_lea.sflag [#allocation3], %s211
        %s213 = sand.u32 %s30, 1
        %s214 = smul.addr %s213, 32
        %s215 = scalar_lea.vmem [#allocation2], %s214
        // Predicated region
        $region41: #{tpu_custom_call.1} parent=39 // pred_check
          %p216 = pneg %p43
        $region42: #{tpu_custom_call.1} parent=39 // pred_check_branch
          %218 = sbr.rel (%p216) target = $region44
        $region43: #{tpu_custom_call.1} parent=39 // pred_region
          %220 = dma.done %s212, 512
        $region44: #{tpu_custom_call.1} parent=39 // pred_fallthru
          _
        %s221 = sand.u32 %s30, 1
        %s222 = scalar_lea.sflag [#allocation3], %s221
        %s223 = sand.u32 %s30, 1
        %s224 = smul.addr %s223, 32
        %s225 = scalar_lea.vmem [#allocation2], %s224
        %p226 = pneg %p43
        %p227 = pneg %p40
        %p228 = pneg %p64
        %p229 = pneg %p61
        %p230 = pneg %p85
        %p231 = pneg %p82
        %p232 = pneg %p106
        %p233 = pneg %p103
        %p234 = pneg %p127
        %p235 = pneg %p124
        %p236 = pneg %p153
        %p237 = pneg %p150
        %s238 = sand.u32 %s140, 1
        %s239 = scalar_lea.sflag [#allocation4], %s238
        %s240 = sand.u32 %s140, 1
        %s241 = smul.addr %s240, 24
        %s242 = scalar_lea.vmem [#allocation5], %s241
        %v243 = vld [vmem:[%s215] sm:$0xff]
        %v244 = vld [vmem:[%s215 + $0x8] sm:$0xff]
        %v245 = vld [vmem:[%s215 + $0x10] sm:$0xff]
        %v246 = vld [vmem:[%s215 + $0x18] sm:$0xff]
        %251 = vrot.lane.b32.xlu0 %v243, 127
        %v252 = vpop.permute.xlu0 %251
        %253 = vrot.lane.b32.xlu0 %v244, 127
        %v254 = vpop.permute.xlu0 %253
        %255 = vrot.lane.b32.xlu0 %v245, 127
        %v256 = vpop.permute.xlu0 %255
        %257 = vrot.lane.b32.xlu0 %v246, 127
        %v258 = vpop.permute.xlu0 %257
        %vm259 = vcmask 1039360
        %v260 = vsel %vm259, %v252, %v254
        %v261 = vsel %vm259, %v254, %v256
        %v262 = vsel %vm259, %v256, %v258
        %266 = vrot.lane.b32.xlu0 %v243, 126
        %v267 = vpop.permute.xlu0 %266
        %268 = vrot.lane.b32.xlu0 %v244, 126
        %v269 = vpop.permute.xlu0 %268
        %270 = vrot.lane.b32.xlu0 %v245, 126
        %v271 = vpop.permute.xlu0 %270
        %272 = vrot.lane.b32.xlu0 %v246, 126
        %v273 = vpop.permute.xlu0 %272
        %vm274 = vcmask 1031168
        %v275 = vsel %vm274, %v267, %v269
        %v276 = vsel %vm274, %v269, %v271
        %v277 = vsel %vm274, %v271, %v273
        %281 = vrot.lane.b32.xlu0 %v243, 110
        %v282 = vpop.permute.xlu0 %281
        %283 = vrot.lane.b32.xlu0 %v244, 110
        %v284 = vpop.permute.xlu0 %283
        %285 = vrot.lane.b32.xlu0 %v245, 110
        %v286 = vpop.permute.xlu0 %285
        %287 = vrot.lane.b32.xlu0 %v246, 110
        %v288 = vpop.permute.xlu0 %287
        %vm289 = vcmask 900096
        %v290 = vsel %vm289, %v282, %v284
        %v291 = vsel %vm289, %v284, %v286
        %v292 = vsel %vm289, %v286, %v288
        %296 = vrot.lane.b32.xlu0 %v243, 109
        %v297 = vpop.permute.xlu0 %296
        %298 = vrot.lane.b32.xlu0 %v244, 109
        %v299 = vpop.permute.xlu0 %298
        %300 = vrot.lane.b32.xlu0 %v245, 109
        %v301 = vpop.permute.xlu0 %300
        %302 = vrot.lane.b32.xlu0 %v246, 109
        %v303 = vpop.permute.xlu0 %302
        %vm304 = vcmask 891904
        %v305 = vsel %vm304, %v297, %v299
        %v306 = vsel %vm304, %v299, %v301
        %v307 = vsel %vm304, %v301, %v303
        %311 = vrot.lane.b32.xlu0 %v243, 108
        %v312 = vpop.permute.xlu0 %311
        %313 = vrot.lane.b32.xlu0 %v244, 108
        %v314 = vpop.permute.xlu0 %313
        %315 = vrot.lane.b32.xlu0 %v245, 108
        %v316 = vpop.permute.xlu0 %315
        %317 = vrot.lane.b32.xlu0 %v246, 108
        %v318 = vpop.permute.xlu0 %317
        %vm319 = vcmask 883712
        %v320 = vsel %vm319, %v312, %v314
        %v321 = vsel %vm319, %v314, %v316
        %v322 = vsel %vm319, %v316, %v318
        %326 = vrot.lane.b32.xlu0 %v243, 92
        %v327 = vpop.permute.xlu0 %326
        %328 = vrot.lane.b32.xlu0 %v244, 92
        %v329 = vpop.permute.xlu0 %328
        %330 = vrot.lane.b32.xlu0 %v245, 92
        %v331 = vpop.permute.xlu0 %330
        %332 = vrot.lane.b32.xlu0 %v246, 92
        %v333 = vpop.permute.xlu0 %332
        %vm334 = vcmask 752640
        %v335 = vsel %vm334, %v327, %v329
        %v336 = vsel %vm334, %v329, %v331
        %v337 = vsel %vm334, %v331, %v333
        %341 = vrot.lane.b32.xlu0 %v243, 91
        %v342 = vpop.permute.xlu0 %341
        %343 = vrot.lane.b32.xlu0 %v244, 91
        %v344 = vpop.permute.xlu0 %343
        %345 = vrot.lane.b32.xlu0 %v245, 91
        %v346 = vpop.permute.xlu0 %345
        %347 = vrot.lane.b32.xlu0 %v246, 91
        %v348 = vpop.permute.xlu0 %347
        %vm349 = vcmask 744448
        %v350 = vsel %vm349, %v342, %v344
        %v351 = vsel %vm349, %v344, %v346
        %v352 = vsel %vm349, %v346, %v348
        %356 = vrot.lane.b32.xlu0 %v243, 90
        %v357 = vpop.permute.xlu0 %356
        %358 = vrot.lane.b32.xlu0 %v244, 90
        %v359 = vpop.permute.xlu0 %358
        %360 = vrot.lane.b32.xlu0 %v245, 90
        %v361 = vpop.permute.xlu0 %360
        %362 = vrot.lane.b32.xlu0 %v246, 90
        %v363 = vpop.permute.xlu0 %362
        %vm364 = vcmask 736256
        %v365 = vsel %vm364, %v357, %v359
        %v366 = vsel %vm364, %v359, %v361
        %v367 = vsel %vm364, %v361, %v363
        %v371 = vld [vmem:[%s1] sm:$0xff]
        %v372 = vld [vmem:[%s1 + $0x8] sm:$0xff]
        %v373 = vld [vmem:[%s2] sm:$0xff]
        %v374 = vld [vmem:[%s2 + $0x8] sm:$0xff]
        %376 = vset.pattern.permute.xlu0 0
        %377 = vperm.xlu0 %376, %v373
        %v378 = vpop.permute.xlu0 %377
        %381 = vset.pattern.permute.xlu0 0
        %382 = vperm.xlu0 %381, %v374
        %v383 = vpop.permute.xlu0 %382
        %vm385 = vcmask 588800
        %v387 = vsel %vm385, %v371, 0
        %v390 = vsel %vm385, %v372, 0
        %392 = vmatpush.msra.mxu0 0.0
        %393 = vmatpush.msra.mxu0 0.0
        %394 = vmatpush.msra.mxu0 0.0
        %395 = vmatpush.msra.mxu0 0.0
        %396 = vmatpush.msra.mxu0 0.0
        %397 = vmatpush.msra.mxu0 0.0
        %398 = vmatpush.msra.mxu0 0.0
        %399 = vmatpush.msra.mxu0 %v365
        %400 = vmatpush.msra.mxu0 %v350
        %401 = vmatpush.msra.mxu0 %v335
        %402 = vmatpush.msra.mxu0 %v320
        %403 = vmatpush.msra.mxu0 %v305
        %404 = vmatpush.msra.mxu0 %v290
        %405 = vmatpush.msra.mxu0 %v275
        %406 = vmatpush.msra.mxu0 %v260
        %407 = vmatpush.msra.mxu0 %v243
        %408 = vmatmul.f32.gmra.mxu0 %v387
        %v409 = vpop.f32.mrf.mxu0
        %v410 = vadd.f32 %v378, %v409
        %411 = vmatmul.f32.gmra.mxu0 %v390
        %v412 = vpop.f32.mrf.mxu0
        %v413 = vadd.f32 %v383, %v412
        %414 = vdwg.mxu0
        %415 = vmatpush.msra.mxu0 0.0
        %416 = vmatpush.msra.mxu0 0.0
        %417 = vmatpush.msra.mxu0 0.0
        %418 = vmatpush.msra.mxu0 0.0
        %419 = vmatpush.msra.mxu0 0.0
        %420 = vmatpush.msra.mxu0 0.0
        %421 = vmatpush.msra.mxu0 0.0
        %422 = vmatpush.msra.mxu0 %v366
        %423 = vmatpush.msra.mxu0 %v351
        %424 = vmatpush.msra.mxu0 %v336
        %425 = vmatpush.msra.mxu0 %v321
        %426 = vmatpush.msra.mxu0 %v306
        %427 = vmatpush.msra.mxu0 %v291
        %428 = vmatpush.msra.mxu0 %v276
        %429 = vmatpush.msra.mxu0 %v261
        %430 = vmatpush.msra.mxu0 %v244
        %431 = vmatmul.f32.gmra.mxu0 %v387
        %v432 = vpop.f32.mrf.mxu0
        %v433 = vadd.f32 %v378, %v432
        %434 = vmatmul.f32.gmra.mxu0 %v390
        %v435 = vpop.f32.mrf.mxu0
        %v436 = vadd.f32 %v383, %v435
        %437 = vdwg.mxu0
        %438 = vmatpush.msra.mxu0 0.0
        %439 = vmatpush.msra.mxu0 0.0
        %440 = vmatpush.msra.mxu0 0.0
        %441 = vmatpush.msra.mxu0 0.0
        %442 = vmatpush.msra.mxu0 0.0
        %443 = vmatpush.msra.mxu0 0.0
        %444 = vmatpush.msra.mxu0 0.0
        %445 = vmatpush.msra.mxu0 %v367
        %446 = vmatpush.msra.mxu0 %v352
        %447 = vmatpush.msra.mxu0 %v337
        %448 = vmatpush.msra.mxu0 %v322
        %449 = vmatpush.msra.mxu0 %v307
        %450 = vmatpush.msra.mxu0 %v292
        %451 = vmatpush.msra.mxu0 %v277
        %452 = vmatpush.msra.mxu0 %v262
        %453 = vmatpush.msra.mxu0 %v245
        %454 = vmatmul.f32.gmra.mxu0 %v387
        %v455 = vpop.f32.mrf.mxu0
        %v456 = vadd.f32 %v378, %v455
        %457 = vmatmul.f32.gmra.mxu0 %v390
        %v458 = vpop.f32.mrf.mxu0
        %v459 = vadd.f32 %v383, %v458
        %460 = vdwg.mxu0
        %v461 = vmax.f32 %v410, 0.0
        %v462 = vmax.f32 %v433, 0.0
        %v463 = vmax.f32 %v456, 0.0
        %v464 = vmax.f32 %v413, 0.0
        %v465 = vmax.f32 %v436, 0.0
        %v466 = vmax.f32 %v459, 0.0
        %v467 = vmin.f32 %v461, 6.0
        %v468 = vmin.f32 %v462, 6.0
        %v469 = vmin.f32 %v463, 6.0
        %v470 = vmin.f32 %v464, 6.0
        %v471 = vmin.f32 %v465, 6.0
        %v472 = vmin.f32 %v466, 6.0
        %v473 = vld [vmem:[%s3] sm:$0xff]
        %v474 = vld [vmem:[%s4] sm:$0xff]
        %476 = vset.pattern.permute.xlu0 0
        %477 = vperm.xlu0 %476, %v474
        %v478 = vpop.permute.xlu0 %477
        %vm480 = vcmask 130048
        %v482 = vsel %vm480, %v473, 0
        %484 = vmatpush.msra.mxu0 0.0
        %485 = vmatpush.msra.mxu0 0.0
        %486 = vmatpush.msra.mxu0 0.0
        %487 = vmatpush.msra.mxu0 0.0
        %488 = vmatpush.msra.mxu0 0.0
        %489 = vmatpush.msra.mxu0 0.0
        %490 = vmatpush.msra.mxu0 0.0
        %491 = vmatpush.msra.mxu0 0.0
        %492 = vmatpush.msra.mxu0 0.0
        %493 = vmatpush.msra.mxu0 0.0
        %494 = vmatpush.msra.mxu0 0.0
        %495 = vmatpush.msra.mxu0 0.0
        %496 = vmatpush.msra.mxu0 0.0
        %497 = vmatpush.msra.mxu0 0.0
        %498 = vmatpush.msra.mxu0 %v470
        %499 = vmatpush.msra.mxu0 %v467
        %500 = vmatmul.f32.gmra.mxu0 %v482
        %v501 = vpop.f32.mrf.mxu0
        %v502 = vadd.f32 %v478, %v501
        %503 = vdwg.mxu0
        %504 = vmatpush.msra.mxu0 0.0
        %505 = vmatpush.msra.mxu0 0.0
        %506 = vmatpush.msra.mxu0 0.0
        %507 = vmatpush.msra.mxu0 0.0
        %508 = vmatpush.msra.mxu0 0.0
        %509 = vmatpush.msra.mxu0 0.0
        %510 = vmatpush.msra.mxu0 0.0
        %511 = vmatpush.msra.mxu0 0.0
        %512 = vmatpush.msra.mxu0 0.0
        %513 = vmatpush.msra.mxu0 0.0
        %514 = vmatpush.msra.mxu0 0.0
        %515 = vmatpush.msra.mxu0 0.0
        %516 = vmatpush.msra.mxu0 0.0
        %517 = vmatpush.msra.mxu0 0.0
        %518 = vmatpush.msra.mxu0 %v471
        %519 = vmatpush.msra.mxu0 %v468
        %520 = vmatmul.f32.gmra.mxu0 %v482
        %v521 = vpop.f32.mrf.mxu0
        %v522 = vadd.f32 %v478, %v521
        %523 = vdwg.mxu0
        %524 = vmatpush.msra.mxu0 0.0
        %525 = vmatpush.msra.mxu0 0.0
        %526 = vmatpush.msra.mxu0 0.0
        %527 = vmatpush.msra.mxu0 0.0
        %528 = vmatpush.msra.mxu0 0.0
        %529 = vmatpush.msra.mxu0 0.0
        %530 = vmatpush.msra.mxu0 0.0
        %531 = vmatpush.msra.mxu0 0.0
        %532 = vmatpush.msra.mxu0 0.0
        %533 = vmatpush.msra.mxu0 0.0
        %534 = vmatpush.msra.mxu0 0.0
        %535 = vmatpush.msra.mxu0 0.0
        %536 = vmatpush.msra.mxu0 0.0
        %537 = vmatpush.msra.mxu0 0.0
        %538 = vmatpush.msra.mxu0 %v472
        %539 = vmatpush.msra.mxu0 %v469
        %540 = vmatmul.f32.gmra.mxu0 %v482
        %v541 = vpop.f32.mrf.mxu0
        %v542 = vadd.f32 %v478, %v541
        %543 = vdwg.mxu0
        %v544 = vadd.f32 %v502, %v305
        %v545 = vadd.f32 %v522, %v306
        %v546 = vadd.f32 %v542, %v307
        %547 = vst [vmem:[%s242] sm:$0xff] %v544
        %548 = vst [vmem:[%s242 + $0x8] sm:$0xff] %v545
        %549 = vst [vmem:[%s242 + $0x10] sm:$0xff] %v546
        %s550 = sand.u32 %s140, 1
        %s551 = scalar_lea.sflag [#allocation4], %s550
        %s552 = sand.u32 %s140, 1
        %s553 = smul.addr %s552, 24
        %s554 = scalar_lea.vmem [#allocation5], %s553
        // Predicated region
        $region45: #{tpu_custom_call.1} parent=39 // pred_check
          %p555 = pneg %p150
        $region46: #{tpu_custom_call.1} parent=39 // pred_check_branch
          %557 = sbr.rel (%p555) target = $region48
        $region47: #{tpu_custom_call.1} parent=39 // pred_region
          %559 = vsyncadd %s551, 0
          %s560 = smul.addr %s22, 3
          %s561 = smul.addr %s560, 8
          %s562 = scalar_lea.hbm %s5, %s561
          %s564 = sshll.u32 %s554, 4
          %s565 = int_to_ptr.vmem [resolvable:$true] %s564
          %s566 = sshll.u32 %s562, 4
          %s567 = int_to_ptr.hbm [resolvable:$true] %s566
          %569 = dma.vmem_to_hbm [thread:$0]  %s565, 384, %s567, %s551
        $region48: #{tpu_custom_call.1} parent=39 // pred_fallthru
          _
      $region40: #{tpu_custom_call.1} parent=5 // pred_fallthru
        _
      %p570 = scmp.le.s32.totalorder 2, %s17
      // Predicated region
      $region49: #{tpu_custom_call.1} parent=5 // pred_check
        %p571 = pneg %p570
      $region50: #{tpu_custom_call.1} parent=5 // pred_check_branch
        %573 = sbr.rel (%p571) target = $region52
      $region51: #{tpu_custom_call.1} parent=5 // pred_region
        %s574 = ssub.s32 %s17, 2
        // Predicated region
        $region53: #{tpu_custom_call.1} parent=51 // pred_check
          %p575 = pneg %p156
        $region54: #{tpu_custom_call.1} parent=51 // pred_check_branch
          %577 = sbr.rel (%p575) target = $region56
        $region55: #{tpu_custom_call.1} parent=51 // pred_region
          %s578 = sand.u32 %s141, 1
          %s579 = scalar_lea.sflag [#allocation4], %s578
          %s580 = sand.u32 %s141, 1
          %s581 = smul.addr %s580, 24
          %s582 = scalar_lea.vmem [#allocation5], %s581
          %584 = dma.done %s579, 384
        $region56: #{tpu_custom_call.1} parent=51 // pred_fallthru
          _
      $region52: #{tpu_custom_call.1} parent=5 // pred_fallthru
        _
    $region6: #{tpu_custom_call.1} parent=1 // loop_footer
      %s21 = sadd.s32 1, %s17
    $region7: #{tpu_custom_call.1} parent=1 // loop_footer_branch
      %16 = sbr.rel target = $region3
    $region8: #{tpu_custom_call.1} parent=1 // loop_exit
      _
    %585 = vsyncpa [#allocation3], 1
    %s586 = scalar_lea.sflag [#allocation3], 1
    %587 = vsyncpa %s586, 1
    %588 = vsyncpa [#allocation4], 1
    %s589 = scalar_lea.sflag [#allocation4], 1
    %590 = vsyncpa %s589, 1

</llo_original>
